<compile_context>
chip_gen: v6e
topology: v6e:2x2x1
jax: 0.10.0
libtpu: 0.0.40
codegen_flags: <defaults>
</compile_context>

<pallas_src>
import functools

import jax
import jax.numpy as jnp
import numpy as np
from jax import lax
from jax.experimental import pallas as pl
from jax.experimental.pallas import tpu as pltpu

LANES = 128
STRIP_ROWS = 256            # rows per in-kernel strip (bounds Mosaic temporaries)


def _tpu_kind():
    try:
        return jax.devices()[0].device_kind.lower()
    except Exception:
        return ""


# --------------------------------------------------------------------------
# Host-side "module init": replicate FocalLossRegression.__init__ (histogram,
# zero-bin fill, inverse-frequency weights).  Pure numpy, deterministic.
# --------------------------------------------------------------------------
def focal_rrse_init(values, num_bins=10):
    values = np.asarray(jax.device_get(values), dtype=np.float32)
    min_val = float(values.min())
    max_val = float(values.max())
    hist, bin_edges = np.histogram(values, bins=num_bins)   # torch.histogram semantics
    frequencies = hist.astype(np.float32) / len(values)
    zero_indices = np.where(hist == 0)[0]
    for idx in zero_indices:
        if idx == 0:
            continue
        frequencies[idx] = frequencies[idx - 1]
    weights = 1.0 / (frequencies + 1.0)
    weights = weights / weights.sum()
    # TODO(synk): smooth_weights branch (num_bins > 99) not implemented (host-side init only).
    return bin_edges.astype(np.float32), weights.astype(np.float32), min_val, max_val


# --------------------------------------------------------------------------
# Compare/select tree for the piecewise-constant weight lookup.
#   breakpoints: python floats, len nb-1 (= bin_edges[2:])
#   values:      python floats, len nb   (= weights)
# Result: values[k] for breakpoints[k-1] <= t < breakpoints[k]
# (values[0] below the first breakpoint, values[-1] at/above the last), which
# matches clip(bucketize(t, edges[1:], right=True)-1, 0, nb-1) -> weights[.].
# --------------------------------------------------------------------------
def _piecewise_weight(t, breakpoints, values):
    k = len(values)
    if k == 1:
        return values[0]                      # python float; broadcast by parent select
    m = k // 2
    lo = _piecewise_weight(t, breakpoints[:m - 1], values[:m])
    hi = _piecewise_weight(t, breakpoints[m:], values[m:])
    return jnp.where(t >= breakpoints[m - 1], hi, lo)


# --------------------------------------------------------------------------
# Pallas kernel: strip-mined elementwise work + sublane reductions, accumulated
# into rows 0..2 of a resident (8,128) output block per shard.
#   row 0: sum((p-t)^2)   row 1: sum(t^2)   row 2: sum(per-element weights)
# --------------------------------------------------------------------------
def _focal_rrse_kernel(p_ref, t_ref, out_ref, *, block_rows, n_full_chunks,
                       last_rows, breakpoints, weight_values,
                       min_val, max_val, penalty_factor):
    c = pl.program_id(0)                       # shard (parallel)
    i = pl.program_id(1)                       # chunk within shard (arbitrary)
    chunk = c * pl.num_programs(1) + i         # logical chunk id

    @pl.when(i == 0)
    def _init():
        out_ref[...] = jnp.zeros_like(out_ref)

    def strip(start, height, acc):
        a1, a2, a3 = acc
        p = p_ref[pl.ds(start, height), :]
        t = t_ref[pl.ds(start, height), :]
        pf = p.astype(jnp.float32)
        tf = t.astype(jnp.float32)
        diff = pf - tf
        # Weight path: compares run in the streamed dtype (bf16 compares on
        # bf16 inputs -> packed-vreg throughput on v6e/v7x; exact on f32).
        # Selected weight values stay f32 for accumulation accuracy.
        w = _piecewise_weight(t, breakpoints, weight_values)
        oob = (p < min_val) | (p > max_val)
        w = jnp.where(oob, w * penalty_factor, w)
        a1 = a1 + jnp.sum(diff * diff, axis=0, keepdims=True)
        a2 = a2 + jnp.sum(tf * tf, axis=0, keepdims=True)
        a3 = a3 + jnp.sum(w.astype(jnp.float32), axis=0, keepdims=True)
        return (a1, a2, a3)

    def process(nrows):                        # nrows is a static python int
        acc = (jnp.zeros((1, LANES), jnp.float32),
               jnp.zeros((1, LANES), jnp.float32),
               jnp.zeros((1, LANES), jnp.float32))
        full = nrows // STRIP_ROWS
        rem = nrows % STRIP_ROWS
        if full > 0:
            def body(s, carry):
                start = pl.multiple_of(s * STRIP_ROWS, STRIP_ROWS)
                return strip(start, STRIP_ROWS, carry)
            acc = lax.fori_loop(0, full, body, acc)
        if rem > 0:
            acc = strip(full * STRIP_ROWS, rem, acc)
        a1, a2, a3 = acc
        out_ref[pl.ds(0, 1), :] += a1
        out_ref[pl.ds(1, 1), :] += a2
        out_ref[pl.ds(2, 1), :] += a3

    # Fast path: chunks whose rows are all valid (no masking of any kind).
    @pl.when(chunk < n_full_chunks)
    def _full_chunk():
        process(block_rows)

    # Partial last chunk: statically shorter strips, still no runtime mask.
    if last_rows > 0:
        @pl.when(chunk == n_full_chunks)
        def _partial_chunk():
            process(last_rows)
    # Clamped duplicate chunks (chunk >= #chunks, only possible with 2 shards
    # and an odd chunk count on v7x) fall through both branches: no compute.


# --------------------------------------------------------------------------
# Wrapper: view as [rows, 128], launch (shards, chunks) grid, scalar epilogue.
# bin_edges / weights / min_val / max_val must be concrete (host) values; they
# are baked into the kernel as compile-time immediates.
# --------------------------------------------------------------------------
def focal_rrse_pallas(predictions, targets, bin_edges, weights, *,
                      alpha=1.0, gamma=2.0, penalty_factor=2.0,
                      min_val, max_val):
    bin_edges_np = np.asarray(jax.device_get(bin_edges), np.float32)
    weights_np = np.asarray(jax.device_get(weights), np.float32)
    num_bins = int(weights_np.shape[0])
    breakpoints = tuple(float(e) for e in bin_edges_np[2:])    # nb-1 breakpoints
    weight_values = tuple(float(w) for w in weights_np)        # nb weight values
    min_val = float(min_val)
    max_val = float(max_val)
    alpha = float(alpha)
    gamma = float(gamma)
    penalty_factor = float(penalty_factor)

    n = int(np.prod(predictions.shape))

    # bf16 streams natively (half HBM bytes); everything else as f32.
    stream_dtype = jnp.bfloat16 if predictions.dtype == jnp.bfloat16 else jnp.float32
    p_flat = predictions.reshape(-1).astype(stream_dtype)
    t_flat = targets.reshape(-1).astype(stream_dtype)

    rows = n // LANES
    tail = n - rows * LANES

    s1 = jnp.float32(0.0)      # sum((p - t)^2)
    s2 = jnp.float32(0.0)      # sum(t^2)
    s3 = jnp.float32(0.0)      # sum(per-element weights)

    if rows > 0:
        # Copy-free reshape when n is lane-aligned; otherwise stream only the
        # aligned prefix (the <=127-element tail is handled in the epilogue).
        if tail:
            p2 = p_flat[: rows * LANES].reshape(rows, LANES)
            t2 = t_flat[: rows * LANES].reshape(rows, LANES)
        else:
            p2 = p_flat.reshape(rows, LANES)
            t2 = t_flat.reshape(rows, LANES)

        kind = _tpu_kind()
        num_shards = 2 if "v7" in kind else 1                    # 2 TCs only on v7x
        max_block_rows = 8192 if ("v6" in kind or "v7" in kind) else 4096
        block_rows = min(max_block_rows, rows)
        chunks = pl.cdiv(rows, block_rows)
        num_shards = min(num_shards, chunks)
        cps = pl.cdiv(chunks, num_shards)                        # chunks per shard

        def stream_map(c, i):
            # Duplicate steps on the short shard re-read the last real chunk;
            # the kernel skips all compute for them.
            return (jnp.minimum(c * cps + i, chunks - 1), 0)

        kernel = functools.partial(
            _focal_rrse_kernel,
            block_rows=block_rows,
            n_full_chunks=rows // block_rows,
            last_rows=rows % block_rows,
            breakpoints=breakpoints,
            weight_values=weight_values,
            min_val=min_val,
            max_val=max_val,
            penalty_factor=penalty_factor,
        )

        out = pl.pallas_call(
            kernel,
            out_shape=jax.ShapeDtypeStruct((num_shards * 8, LANES), jnp.float32),
            grid_spec=pltpu.PrefetchScalarGridSpec(
                num_scalar_prefetch=0,
                grid=(num_shards, cps),
                in_specs=[
                    pl.BlockSpec((block_rows, LANES), stream_map),   # predictions
                    pl.BlockSpec((block_rows, LANES), stream_map),   # targets
                ],
                out_specs=pl.BlockSpec((8, LANES), lambda c, i: (c, 0)),
            ),
            compiler_params=pltpu.CompilerParams(
                dimension_semantics=("parallel", "arbitrary")),
        )(p2, t2)

        out = out.reshape(num_shards, 8, LANES)
        s1 = jnp.sum(out[:, 0, :])
        s2 = jnp.sum(out[:, 1, :])
        s3 = jnp.sum(out[:, 2, :])

    if tail > 0:
        # <=127-element flat tail: tiny pure-JAX epilogue.
        pt = p_flat[rows * LANES:].astype(jnp.float32)
        tt = t_flat[rows * LANES:].astype(jnp.float32)
        s1 = s1 + jnp.sum((pt - tt) ** 2)
        s2 = s2 + jnp.sum(tt ** 2)
        idx = jnp.sum(tt[:, None] >= jnp.asarray(bin_edges_np[1:]), axis=-1) - 1
        idx = jnp.clip(idx, 0, num_bins - 1)
        tw = jnp.asarray(weights_np)[idx]
        tw = jnp.where((pt < min_val) | (pt > max_val), tw * penalty_factor, tw)
        s3 = s3 + jnp.sum(tw)

    errors = jnp.sqrt((s1 / n) / s2)                  # RRSE scalar
    return alpha * (errors ** gamma) * (s3 / n)       # mean(w * errors**gamma)


# --------------------------------------------------------------------------
# Pure-JAX reference (correctness check only).
# --------------------------------------------------------------------------
def focal_rrse_ref(predictions, targets, bin_edges, weights, *,
                   alpha, gamma, penalty_factor, min_val, max_val):
    bin_edges = jnp.asarray(bin_edges)
    weights = jnp.asarray(weights)
    num_bins = weights.shape[0]
    errors = jnp.sqrt(jnp.mean((predictions - targets) ** 2)
                      / jnp.sum(targets ** 2))
    idx = jnp.sum(targets[..., None] >= bin_edges[1:], axis=-1) - 1
    idx = jnp.clip(idx, 0, num_bins - 1)
    tw = weights[idx]
    oob = (predictions < min_val) | (predictions > max_val)
    tw = jnp.where(oob, tw * penalty_factor, tw)
    return alpha * jnp.mean(tw * errors ** gamma)


if __name__ == "__main__":
    key = jax.random.PRNGKey(0)
    k_vals, k_pred, k_targ, k_pred2, k_targ2 = jax.random.split(key, 5)

    # "values" used to build the histogram / bins at module init
    values = jax.random.normal(k_vals, (512,), dtype=jnp.float32)
    bin_edges, weights, min_val, max_val = focal_rrse_init(values, num_bins=10)
    kwargs = dict(alpha=1.0, gamma=2.0, penalty_factor=2.0,
                  min_val=min_val, max_val=max_val)

    # primary small-shape forward (NCHW-like, lane-aligned, single chunk)
    predictions = jax.random.normal(k_pred, (2, 4, 16, 16), dtype=jnp.float32) * 1.5
    targets = jax.random.normal(k_targ, (2, 4, 16, 16), dtype=jnp.float32)
    loss = jax.block_until_ready(
        focal_rrse_pallas(predictions, targets, bin_edges, weights, **kwargs))
    loss_ref = focal_rrse_ref(predictions, targets, bin_edges, weights, **kwargs)
    np.testing.assert_allclose(np.asarray(loss), np.asarray(loss_ref),
                               rtol=1e-4, atol=0.0)

    # secondary check: exercises the in-kernel strip loop, the static
    # remainder strip, and the ragged-tail epilogue (n not a multiple of 128)
    p2 = jax.random.normal(k_pred2, (2, 5, 60, 61), dtype=jnp.float32) * 1.5
    t2 = jax.random.normal(k_targ2, (2, 5, 60, 61), dtype=jnp.float32)
    loss2 = jax.block_until_ready(
        focal_rrse_pallas(p2, t2, bin_edges, weights, **kwargs))
    loss2_ref = focal_rrse_ref(p2, t2, bin_edges, weights, **kwargs)
    np.testing.assert_allclose(np.asarray(loss2), np.asarray(loss2_ref),
                               rtol=1e-4, atol=0.0)

    print("KERNEL_OK")
</pallas_src>

<mosaic_0001>
module attributes {stable_mosaic.version = 11 : i64} {
  func.func @_focal_rrse_kernel(%arg0: i32, %arg1: i32, %arg2: memref<16x128xf32, #tpu.memory_space<vmem>>, %arg3: memref<16x128xf32, #tpu.memory_space<vmem>>, %arg4: memref<8x128xf32, #tpu.memory_space<vmem>>) attributes {dimension_semantics = [#tpu.dimension_semantics<parallel>, #tpu.dimension_semantics<arbitrary>], iteration_bounds = array<i64: 1, 1>, scalar_prefetch = 0 : i64, scratch_operands = 0 : i64, tpu.core_type = #tpu.core_type<tc>, window_params = [{transform_indices = @transform_0, window_bounds = array<i64: 16, 128>}, {transform_indices = @transform_1, window_bounds = array<i64: 16, 128>}, {transform_indices = @transform_2, window_bounds = array<i64: 8, 128>}]} {
    %c1_i32 = arith.constant 1 : i32
    %0 = arith.muli %arg0, %c1_i32 : i32
    %1 = arith.addi %0, %arg1 : i32
    %c0_i32 = arith.constant 0 : i32
    %2 = arith.cmpi eq, %arg1, %c0_i32 : i32
    %3 = arith.extui %2 : i1 to i32
    %c0_i32_0 = arith.constant 0 : i32
    %4 = arith.cmpi ne, %3, %c0_i32_0 : i32
    scf.if %4 {
      %cst = arith.constant 0.000000e+00 : f32
      %8 = vector.broadcast %cst : f32 to vector<8x128xf32>
      %c0 = arith.constant 0 : index
      %c0_3 = arith.constant 0 : index
      %9 = vector.load %arg4[%c0, %c0_3] : memref<8x128xf32, #tpu.memory_space<vmem>>, vector<8x128xf32>
      tpu.vector_store %arg4[%c0, %c0_3], %8 {strides = array<i32>} : memref<8x128xf32, #tpu.memory_space<vmem>>, vector<8x128xf32>,
    } else {
    }
    %c1_i32_1 = arith.constant 1 : i32
    %5 = arith.cmpi slt, %1, %c1_i32_1 : i32
    %6 = arith.extui %5 : i1 to i32
    %c0_i32_2 = arith.constant 0 : i32
    %7 = arith.cmpi ne, %6, %c0_i32_2 : i32
    scf.if %7 {
      %cst = arith.constant 0.000000e+00 : f32
      %8 = vector.broadcast %cst : f32 to vector<1x128xf32>
      %cst_3 = arith.constant 0.000000e+00 : f32
      %9 = vector.broadcast %cst_3 : f32 to vector<1x128xf32>
      %cst_4 = arith.constant 0.000000e+00 : f32
      %10 = vector.broadcast %cst_4 : f32 to vector<1x128xf32>
      %c0 = arith.constant 0 : index
      %c0_5 = arith.constant 0 : index
      %11 = vector.load %arg2[%c0, %c0_5] : memref<16x128xf32, #tpu.memory_space<vmem>>, vector<16x128xf32>
      %c0_6 = arith.constant 0 : index
      %c0_7 = arith.constant 0 : index
      %12 = vector.load %arg3[%c0_6, %c0_7] : memref<16x128xf32, #tpu.memory_space<vmem>>, vector<16x128xf32>
      %13 = arith.subf %11, %12 : vector<16x128xf32>
      %cst_8 = arith.constant -1.77999091 : f32
      %14 = vector.broadcast %cst_8 : f32 to vector<16x128xf32>
      %15 = arith.cmpf oge, %12, %14 : vector<16x128xf32>
      %cst_9 = arith.constant 0.106206685 : f32
      %cst_10 = arith.constant 0.108256996 : f32
      %16 = vector.broadcast %cst_9 : f32 to vector<16x128xf32>
      %17 = vector.broadcast %cst_10 : f32 to vector<16x128xf32>
      %18 = arith.select %15, %16, %17 : vector<16x128xi1>, vector<16x128xf32>
      %cst_11 = arith.constant -0.104305267 : f32
      %19 = vector.broadcast %cst_11 : f32 to vector<16x128xf32>
      %20 = arith.cmpf oge, %12, %19 : vector<16x128xf32>
      %cst_12 = arith.constant 0.0917792618 : f32
      %cst_13 = arith.constant 0.092689462 : f32
      %21 = vector.broadcast %cst_12 : f32 to vector<16x128xf32>
      %22 = vector.broadcast %cst_13 : f32 to vector<16x128xf32>
      %23 = arith.select %20, %21, %22 : vector<16x128xi1>, vector<16x128xf32>
      %cst_14 = arith.constant -0.662867069 : f32
      %24 = vector.broadcast %cst_14 : f32 to vector<16x128xf32>
      %25 = arith.cmpf oge, %12, %24 : vector<16x128xf32>
      %cst_15 = arith.constant 0.102330521 : f32
      %26 = vector.broadcast %cst_15 : f32 to vector<16x128xf32>
      %27 = arith.select %25, %23, %26 : vector<16x128xi1>, vector<16x128xf32>
      %cst_16 = arith.constant -1.22142899 : f32
      %28 = vector.broadcast %cst_16 : f32 to vector<16x128xf32>
      %29 = arith.cmpf oge, %12, %28 : vector<16x128xf32>
      %30 = arith.select %29, %27, %18 : vector<16x128xi1>, vector<16x128xf32>
      %cst_17 = arith.constant 1.01281881 : f32
      %31 = vector.broadcast %cst_17 : f32 to vector<16x128xf32>
      %32 = arith.cmpf oge, %12, %31 : vector<16x128xf32>
      %cst_18 = arith.constant 0.0931513682 : f32
      %cst_19 = arith.constant 0.0920806676 : f32
      %33 = vector.broadcast %cst_18 : f32 to vector<16x128xf32>
      %34 = vector.broadcast %cst_19 : f32 to vector<16x128xf32>
      %35 = arith.select %32, %33, %34 : vector<16x128xi1>, vector<16x128xf32>
      %cst_20 = arith.constant 2.68850398 : f32
      %36 = vector.broadcast %cst_20 : f32 to vector<16x128xf32>
      %37 = arith.cmpf oge, %12, %36 : vector<16x128xf32>
      %cst_21 = arith.constant 0.107633635 : f32
      %cst_22 = arith.constant 0.105013348 : f32
      %38 = vector.broadcast %cst_21 : f32 to vector<16x128xf32>
      %39 = vector.broadcast %cst_22 : f32 to vector<16x128xf32>
      %40 = arith.select %37, %38, %39 : vector<16x128xi1>, vector<16x128xf32>
      %cst_23 = arith.constant 2.12994242 : f32
      %41 = vector.broadcast %cst_23 : f32 to vector<16x128xf32>
      %42 = arith.cmpf oge, %12, %41 : vector<16x128xf32>
      %cst_24 = arith.constant 0.100858144 : f32
      %43 = vector.broadcast %cst_24 : f32 to vector<16x128xf32>
      %44 = arith.select %42, %40, %43 : vector<16x128xi1>, vector<16x128xf32>
      %cst_25 = arith.constant 1.57138062 : f32
      %45 = vector.broadcast %cst_25 : f32 to vector<16x128xf32>
      %46 = arith.cmpf oge, %12, %45 : vector<16x128xf32>
      %47 = arith.select %46, %44, %35 : vector<16x128xi1>, vector<16x128xf32>
      %cst_26 = arith.constant 0.454256773 : f32
      %48 = vector.broadcast %cst_26 : f32 to vector<16x128xf32>
      %49 = arith.cmpf oge, %12, %48 : vector<16x128xf32>
      %50 = arith.select %49, %47, %30 : vector<16x128xi1>, vector<16x128xf32>
      %cst_27 = arith.constant -2.89711475 : f32
      %51 = vector.broadcast %cst_27 : f32 to vector<16x128xf32>
      %52 = arith.cmpf olt, %11, %51 : vector<16x128xf32>
      %cst_28 = arith.constant 2.68850398 : f32
      %53 = vector.broadcast %cst_28 : f32 to vector<16x128xf32>
      %54 = arith.cmpf ogt, %11, %53 : vector<16x128xf32>
      %55 = arith.ori %52, %54 : vector<16x128xi1>
      %cst_29 = arith.constant 2.000000e+00 : f32
      %56 = vector.broadcast %cst_29 : f32 to vector<16x128xf32>
      %57 = arith.mulf %50, %56 : vector<16x128xf32>
      %58 = arith.select %55, %57, %50 : vector<16x128xi1>, vector<16x128xf32>
      %59 = arith.mulf %13, %13 : vector<16x128xf32>
      %cst_30 = arith.constant dense<0.000000e+00> : vector<128xf32>
      %60 = vector.multi_reduction <add>, %59, %cst_30 [0] : vector<16x128xf32> to vector<128xf32>
      %61 = vector.shape_cast %60 : vector<128xf32> to vector<1x128xf32>
      %62 = arith.addf %8, %61 : vector<1x128xf32>
      %63 = arith.mulf %12, %12 : vector<16x128xf32>
      %cst_31 = arith.constant dense<0.000000e+00> : vector<128xf32>
      %64 = vector.multi_reduction <add>, %63, %cst_31 [0] : vector<16x128xf32> to vector<128xf32>
      %65 = vector.shape_cast %64 : vector<128xf32> to vector<1x128xf32>
      %66 = arith.addf %9, %65 : vector<1x128xf32>
      %cst_32 = arith.constant dense<0.000000e+00> : vector<128xf32>
      %67 = vector.multi_reduction <add>, %58, %cst_32 [0] : vector<16x128xf32> to vector<128xf32>
      %68 = vector.shape_cast %67 : vector<128xf32> to vector<1x128xf32>
      %69 = arith.addf %10, %68 : vector<1x128xf32>
      %c0_33 = arith.constant 0 : index
      %c0_34 = arith.constant 0 : index
      %70 = vector.load %arg4[%c0_33, %c0_34] : memref<8x128xf32, #tpu.memory_space<vmem>>, vector<1x128xf32>
      %71 = arith.addf %70, %62 : vector<1x128xf32>
      %c0_35 = arith.constant 0 : index
      %c0_36 = arith.constant 0 : index
      %72 = vector.load %arg4[%c0_35, %c0_36] : memref<8x128xf32, #tpu.memory_space<vmem>>, vector<1x128xf32>
      tpu.vector_store %arg4[%c0_35, %c0_36], %71 {strides = array<i32>} : memref<8x128xf32, #tpu.memory_space<vmem>>, vector<1x128xf32>,
      %c1 = arith.constant 1 : index
      %c0_37 = arith.constant 0 : index
      %73 = vector.load %arg4[%c1, %c0_37] : memref<8x128xf32, #tpu.memory_space<vmem>>, vector<1x128xf32>
      %74 = arith.addf %73, %66 : vector<1x128xf32>
      %c1_38 = arith.constant 1 : index
      %c0_39 = arith.constant 0 : index
      %75 = vector.load %arg4[%c1_38, %c0_39] : memref<8x128xf32, #tpu.memory_space<vmem>>, vector<1x128xf32>
      tpu.vector_store %arg4[%c1_38, %c0_39], %74 {strides = array<i32>} : memref<8x128xf32, #tpu.memory_space<vmem>>, vector<1x128xf32>,
      %c2 = arith.constant 2 : index
      %c0_40 = arith.constant 0 : index
      %76 = vector.load %arg4[%c2, %c0_40] : memref<8x128xf32, #tpu.memory_space<vmem>>, vector<1x128xf32>
      %77 = arith.addf %76, %69 : vector<1x128xf32>
      %c2_41 = arith.constant 2 : index
      %c0_42 = arith.constant 0 : index
      %78 = vector.load %arg4[%c2_41, %c0_42] : memref<8x128xf32, #tpu.memory_space<vmem>>, vector<1x128xf32>
      tpu.vector_store %arg4[%c2_41, %c0_42], %77 {strides = array<i32>} : memref<8x128xf32, #tpu.memory_space<vmem>>, vector<1x128xf32>,
    } else {
    }
    return
  }
  func.func @transform_0(%arg0: i32, %arg1: i32) -> (i32, i32) {
    %c1_i32 = arith.constant 1 : i32
    %0 = arith.muli %arg0, %c1_i32 : i32
    %1 = arith.addi %0, %arg1 : i32
    %c0_i32 = arith.constant 0 : i32
    %2 = arith.minsi %1, %c0_i32 : i32
    %c0_i32_0 = arith.constant 0 : i32
    %c0_i32_1 = arith.constant 0 : i32
    return %2, %c0_i32_0 : i32, i32
  }
  func.func @transform_1(%arg0: i32, %arg1: i32) -> (i32, i32) {
    %c1_i32 = arith.constant 1 : i32
    %0 = arith.muli %arg0, %c1_i32 : i32
    %1 = arith.addi %0, %arg1 : i32
    %c0_i32 = arith.constant 0 : i32
    %2 = arith.minsi %1, %c0_i32 : i32
    %c0_i32_0 = arith.constant 0 : i32
    %c0_i32_1 = arith.constant 0 : i32
    return %2, %c0_i32_0 : i32, i32
  }
  func.func @transform_2(%arg0: i32, %arg1: i32) -> (i32, i32) {
    %c0_i32 = arith.constant 0 : i32
    %c0_i32_0 = arith.constant 0 : i32
    return %arg0, %c0_i32 : i32, i32
  }
}

</mosaic_0001>

<llo_original>
// kernel: tpu_custom_call.1
$region0: #{tpu_custom_call.1}
  #allocation0 [shape = 'u32[]', space=smem, size = 0x4, offset = 0x4, fixed_abs, tag = 'smem constant byte address 0x4 - core index']
  #allocation1 [shape = 'u32[144,128]{1,0:T(1,128)}', space=vmem, size = 0x12000, scoped, tag = 'internal scratch']
  %s0 = inlined_call_operand.hbm [shape: f32[16,128], index: 0, kind: input, shape index: {}]
  %s1 = inlined_call_operand.hbm [shape: f32[16,128], index: 1, kind: input, shape index: {}]
  %s2 = inlined_call_operand.hbm [shape: f32[8,128], index: 2, kind: output, shape index: {}]
  %s3 = sld [smem:[#allocation0]]
  $region34: #{tpu_custom_call.1} parent=0
    _
  %s5 = ssub.s32 1, %s3
  %s6 = scalar_select 0, %s5, %s3
  $region1: #{tpu_custom_call.1} parent=0
    #allocation2 [shape = 'u8[8192]{0}', space=vmem, size = 0x2000, scoped, tag = 'input window, operand 0, single buffered']
    #allocation3 [shape = 's32[1]{0}', space=sflag, size = 0x4, scoped, tag = 'scoped memory for tpu_custom_call.1']
    #allocation4 [shape = 's32[1]{0}', space=sflag, size = 0x4, scoped, tag = 'scoped memory for tpu_custom_call.1']
    #allocation5 [shape = 'u8[8192]{0}', space=vmem, size = 0x2000, scoped, tag = 'input window, operand 1, single buffered']
    #allocation6 [shape = 's32[1]{0}', space=sflag, size = 0x4, scoped, tag = 'scoped memory for tpu_custom_call.1']
    #allocation7 [shape = 'u8[4096]{0}', space=vmem, size = 0x1000, scoped, tag = 'output window, operand 0, single buffered']
    %7 = vsyncpa [#allocation3], 0
    %8 = vsyncpa [#allocation6], 0
    %9 = vsyncpa [#allocation4], 0
    // Predicated region
    $region2: #{tpu_custom_call.1} parent=1 // pred_check
      _
    $region3: #{tpu_custom_call.1} parent=1 // pred_check_branch
      %11 = sbr.rel (0) target = $region5
    $region4: #{tpu_custom_call.1} parent=1 // pred_region
      %s12 = sadd.s32 0, 0
      %p13 = scmp.lt.s32.totalorder %s12, 0
      %s14 = scalar_select %p13, %s12, 0
      %s15 = smul.u32 2, %s14
      %s17 = ssub.s32 256, 256
      %18 = vsyncadd [#allocation3], %s17
      %s19 = smul.addr %s15, 128
      %s20 = scalar_lea.hbm %s0, %s19
      %s21 = sshll.u32 [#allocation2], 4
      %s22 = int_to_ptr.vmem [resolvable:$true] %s21
      %27 = dma.hbm_to_vmem [thread:$0]  %s20, 256, %s22, [#allocation3], 128, 128, 8
    $region5: #{tpu_custom_call.1} parent=1 // pred_fallthru
      _
    // Predicated region
    $region6: #{tpu_custom_call.1} parent=1 // pred_check
      _
    $region7: #{tpu_custom_call.1} parent=1 // pred_check_branch
      %29 = sbr.rel (0) target = $region9
    $region8: #{tpu_custom_call.1} parent=1 // pred_region
      %s30 = sadd.s32 0, 0
      %p31 = scmp.lt.s32.totalorder %s30, 0
      %s32 = scalar_select %p31, %s30, 0
      %s33 = smul.u32 2, %s32
      %s35 = ssub.s32 256, 256
      %36 = vsyncadd [#allocation6], %s35
      %s37 = smul.addr %s33, 128
      %s38 = scalar_lea.hbm %s1, %s37
      %s39 = sshll.u32 [#allocation5], 4
      %s40 = int_to_ptr.vmem [resolvable:$true] %s39
      %45 = dma.hbm_to_vmem [thread:$0]  %s38, 256, %s40, [#allocation6], 128, 128, 8
    $region9: #{tpu_custom_call.1} parent=1 // pred_fallthru
      _
    // Predicated region
    $region10: #{tpu_custom_call.1} parent=1 // pred_check
      _
    $region11: #{tpu_custom_call.1} parent=1 // pred_check_branch
      %47 = sbr.rel (0) target = $region13
    $region12: #{tpu_custom_call.1} parent=1 // pred_region
      %48 = dma.done [#allocation3], 256
    $region13: #{tpu_custom_call.1} parent=1 // pred_fallthru
      _
    // Predicated region
    $region14: #{tpu_custom_call.1} parent=1 // pred_check
      _
    $region15: #{tpu_custom_call.1} parent=1 // pred_check_branch
      %50 = sbr.rel (0) target = $region17
    $region16: #{tpu_custom_call.1} parent=1 // pred_region
      %51 = dma.done [#allocation6], 256
    $region17: #{tpu_custom_call.1} parent=1 // pred_fallthru
      _
    %s52 = sadd.s32 0, 0
    %p53 = scmp.lt.s32.totalorder %s52, 0
    %s54 = scalar_select %p53, %s52, 0
    %s55 = smul.u32 2, %s54
    %s56 = sadd.s32 0, 0
    %p57 = scmp.lt.s32.totalorder %s56, 0
    %s58 = scalar_select %p57, %s56, 0
    %s59 = smul.u32 2, %s58
    %s60 = sadd.s32 0, 0
    %p61 = scmp.eq.s32.totalorder 0, 0
    // Predicated region
    $region18: #{tpu_custom_call.1} parent=1 // pred_check
      %p62 = pneg %p61
    $region19: #{tpu_custom_call.1} parent=1 // pred_check_branch
      %64 = sbr.rel (%p62) target = $region21
    $region20: #{tpu_custom_call.1} parent=1 // pred_region
      %65 = vst [vmem:[#allocation7] sm:$0xff] 0.0
    $region21: #{tpu_custom_call.1} parent=1 // pred_fallthru
      _
    %p66 = scmp.lt.s32.totalorder %s60, 1
    // Predicated region
    $region22: #{tpu_custom_call.1} parent=1 // pred_check
      %p67 = pneg %p66
    $region23: #{tpu_custom_call.1} parent=1 // pred_check_branch
      %69 = sbr.rel (%p67) target = $region25
    $region24: #{tpu_custom_call.1} parent=1 // pred_region
      %v70 = vld [vmem:[#allocation2] sm:$0xff]
      %v71 = vld [vmem:[#allocation2 + $0x8] sm:$0xff]
      %v72 = vld [vmem:[#allocation5] sm:$0xff]
      %v73 = vld [vmem:[#allocation5 + $0x8] sm:$0xff]
      %v74 = vsub.f32 %v70, %v72
      %v75 = vsub.f32 %v71, %v73
      %vm76 = vcmp.ge.f32.partialorder %v72, -1.7799909
      %vm77 = vcmp.ge.f32.partialorder %v73, -1.7799909
      %v78 = vsel %vm76, 0.106206685, 0.108256996
      %v79 = vsel %vm77, 0.106206685, 0.108256996
      %vm80 = vcmp.ge.f32.partialorder %v72, -0.10430527
      %vm81 = vcmp.ge.f32.partialorder %v73, -0.10430527
      %v82 = vsel %vm80, 0.09177926, 0.09268946
      %v83 = vsel %vm81, 0.09177926, 0.09268946
      %vm84 = vcmp.ge.f32.partialorder %v72, -0.66286707
      %vm85 = vcmp.ge.f32.partialorder %v73, -0.66286707
      %v86 = vsel %vm84, %v82, 0.10233052
      %v87 = vsel %vm85, %v83, 0.10233052
      %vm88 = vcmp.ge.f32.partialorder %v72, -1.221429
      %vm89 = vcmp.ge.f32.partialorder %v73, -1.221429
      %v90 = vsel %vm88, %v86, %v78
      %v91 = vsel %vm89, %v87, %v79
      %vm92 = vcmp.ge.f32.partialorder %v72, 1.0128188
      %vm93 = vcmp.ge.f32.partialorder %v73, 1.0128188
      %v94 = vsel %vm92, 0.09315137, 0.09208067
      %v95 = vsel %vm93, 0.09315137, 0.09208067
      %vm96 = vcmp.ge.f32.partialorder %v72, 2.688504
      %vm97 = vcmp.ge.f32.partialorder %v73, 2.688504
      %v98 = vsel %vm96, 0.107633635, 0.10501335
      %v99 = vsel %vm97, 0.107633635, 0.10501335
      %vm100 = vcmp.ge.f32.partialorder %v72, 2.1299424
      %vm101 = vcmp.ge.f32.partialorder %v73, 2.1299424
      %v102 = vsel %vm100, %v98, 0.100858144
      %v103 = vsel %vm101, %v99, 0.100858144
      %vm104 = vcmp.ge.f32.partialorder %v72, 1.5713806
      %vm105 = vcmp.ge.f32.partialorder %v73, 1.5713806
      %v106 = vsel %vm104, %v102, %v94
      %v107 = vsel %vm105, %v103, %v95
      %vm108 = vcmp.ge.f32.partialorder %v72, 0.45425677
      %vm109 = vcmp.ge.f32.partialorder %v73, 0.45425677
      %v110 = vsel %vm108, %v106, %v90
      %v111 = vsel %vm109, %v107, %v91
      %vm112 = vcmp.lt.f32.partialorder %v70, -2.8971148
      %vm113 = vcmp.lt.f32.partialorder %v71, -2.8971148
      %vm114 = vcmp.gt.f32.partialorder %v70, 2.688504
      %vm115 = vcmp.gt.f32.partialorder %v71, 2.688504
      %vm116 = vmor %vm112, %vm114
      %vm117 = vmor %vm113, %vm115
      %v118 = vmul.f32 %v110, 2.0
      %v119 = vmul.f32 %v111, 2.0
      %v120 = vsel %vm116, %v118, %v110
      %v121 = vsel %vm117, %v119, %v111
      %v122 = vmul.f32 %v74, %v74
      %v123 = vmul.f32 %v75, %v75
      %v124 = vadd.f32 %v122, %v123
      %v125 = vrot.slane %v124, 4
      %v126 = vadd.f32 %v124, %v125
      %v127 = vrot.slane %v126, 2
      %v128 = vadd.f32 %v126, %v127
      %v129 = vrot.slane %v128, 1
      %v130 = vadd.f32 %v128, %v129
      %v131 = vadd.f32 %v130, 0.0
      %v132 = vmul.f32 %v72, %v72
      %v133 = vmul.f32 %v73, %v73
      %v134 = vadd.f32 %v132, %v133
      %v135 = vrot.slane %v134, 4
      %v136 = vadd.f32 %v134, %v135
      %v137 = vrot.slane %v136, 2
      %v138 = vadd.f32 %v136, %v137
      %v139 = vrot.slane %v138, 1
      %v140 = vadd.f32 %v138, %v139
      %v141 = vadd.f32 %v140, 0.0
      %v142 = vadd.f32 %v120, %v121
      %v143 = vrot.slane %v142, 4
      %v144 = vadd.f32 %v142, %v143
      %v145 = vrot.slane %v144, 2
      %v146 = vadd.f32 %v144, %v145
      %v147 = vrot.slane %v146, 1
      %v148 = vadd.f32 %v146, %v147
      %v149 = vadd.f32 %v148, 0.0
      %v150 = vld [vmem:[#allocation7] sm:$0x1]
      %v151 = vadd.f32 %v150, %v131
      %152 = vst [vmem:[#allocation7] sm:$0x1] %v151
      %v153 = vld [vmem:[#allocation7 + $0x1] sm:$0x1]
      %v154 = vadd.f32 %v153, %v141
      %155 = vst [vmem:[#allocation7 + $0x1] sm:$0x1] %v154
      %v156 = vld [vmem:[#allocation7 + $0x2] sm:$0x1]
      %v157 = vadd.f32 %v156, %v149
      %158 = vst [vmem:[#allocation7 + $0x2] sm:$0x1] %v157
    $region25: #{tpu_custom_call.1} parent=1 // pred_fallthru
      _
    // Predicated region
    $region26: #{tpu_custom_call.1} parent=1 // pred_check
      _
    $region27: #{tpu_custom_call.1} parent=1 // pred_check_branch
      %160 = sbr.rel (0) target = $region29
    $region28: #{tpu_custom_call.1} parent=1 // pred_region
      %s162 = ssub.s32 128, 128
      %163 = vsyncadd [#allocation4], %s162
      %s165 = sshll.u32 [#allocation7], 4
      %s166 = int_to_ptr.vmem [resolvable:$true] %s165
      %168 = dma.vmem_to_hbm [thread:$0]  %s166, 128, %s2, [#allocation4]
    $region29: #{tpu_custom_call.1} parent=1 // pred_fallthru
      _
    // Predicated region
    $region30: #{tpu_custom_call.1} parent=1 // pred_check
      _
    $region31: #{tpu_custom_call.1} parent=1 // pred_check_branch
      %170 = sbr.rel (0) target = $region33
    $region32: #{tpu_custom_call.1} parent=1 // pred_region
      %171 = dma.done [#allocation4], 128
    $region33: #{tpu_custom_call.1} parent=1 // pred_fallthru
      _
    %172 = vsyncpa [#allocation3], 1
    %173 = vsyncpa [#allocation6], 1
    %174 = vsyncpa [#allocation4], 1

</llo_original>
